<compile_context>
chip_gen: v5e
topology: v5e:2x2
jax: 0.10.0
libtpu: 0.0.40
codegen_flags: <defaults>
</compile_context>

<pallas_src>
import jax
import jax.numpy as jnp
from jax.experimental import pallas as pl
from jax.experimental.pallas import tpu as pltpu


def linreg_kernel(x_ref, params_ref, o_ref):
    # params_ref is in SMEM: [w0, w1, b] -> scalar reads feed the VPU directly.
    w0 = params_ref[0]
    w1 = params_ref[1]
    b = params_ref[2]
    # x_ref: (2, tile_r, C) feature-major, fully dense tiles.  Pure VPU FMA.
    o_ref[...] = x_ref[0] * w0 + x_ref[1] * w1 + b


def _round_up(a, b):
    return ((a + b - 1) // b) * b


def linreg_forward(x, weight, bias, *, lane_cols=1024, max_tile_rows=256):
    """Forward pass of nn.Linear(2, 1).

    x:      (N, 2) float32   (same layout the PyTorch module receives)
    weight: (1, 2) float32   (nn.Linear weight: out_features x in_features)
    bias:   (1,)   float32
    returns (N, 1) float32
    """
    n, d_in = x.shape
    assert d_in == 2 and weight.shape == (1, 2) and bias.shape == (1,)

    # --- choose a dense (R, C) slab layout for the batch dimension ---------
    # C: lane width (multiple of 128); tile_r: sublane rows per grid step
    # (multiple of 8).  Rows are split as evenly as possible into <=256-row
    # tiles so padding stays small for any N, and the grid divides exactly.
    C = min(lane_cols, _round_up(n, 128))
    rows = pl.cdiv(n, C)
    rows8 = _round_up(rows, 8)
    n_tiles = pl.cdiv(rows8, max_tile_rows)
    tile_r = _round_up(pl.cdiv(rows8, n_tiles), 8)
    R = n_tiles * tile_r
    n_pad = R * C
    grid = (n_tiles,)

    # --- layout plumbing (outside the kernel) -------------------------------
    # Feature-major + padded + reshaped to dense slabs: (2, R, C).
    xt = x.astype(jnp.float32).T                       # (2, N)
    if n_pad != n:
        xt = jnp.pad(xt, ((0, 0), (0, n_pad - n)))     # (2, N_pad)
    xt = xt.reshape(2, R, C)

    # Scalar parameters -> SMEM: [w0, w1, b].
    params = jnp.concatenate(
        [weight.reshape(-1), bias.reshape(-1)]).astype(jnp.float32)  # (3,)

    out = pl.pallas_call(
        linreg_kernel,
        out_shape=jax.ShapeDtypeStruct((R, C), jnp.float32),
        grid_spec=pltpu.PrefetchScalarGridSpec(
            num_scalar_prefetch=0,
            grid=grid,
            in_specs=[
                # X slab: tile the row (sublane) axis; lanes stay full width.
                pl.BlockSpec((2, tile_r, C), lambda i: (0, i, 0)),
                # Weights/bias as whole-array SMEM scalars.
                pl.BlockSpec(memory_space=pltpu.MemorySpace.SMEM),
            ],
            out_specs=pl.BlockSpec((tile_r, C), lambda i: (i, 0)),
        ),
        compiler_params=pltpu.CompilerParams(
            dimension_semantics=("parallel",),  # megacore sharding on v7x
        ),
    )(xt, params)

    # Dense slab -> (N, 1): flatten (free, same row-major layout), drop the
    # padded tail, add the trailing unit feature dim.
    return out.reshape(n_pad)[:n].reshape(n, 1)


if __name__ == "__main__":
    key0, key1 = jax.random.split(jax.random.PRNGKey(0))

    # nn.Linear(2, 1) parameters (deterministic).
    weight = jnp.array([[2.0, -3.4]], dtype=jnp.float32)   # (1, 2)
    bias = jnp.array([4.2], dtype=jnp.float32)              # (1,)

    # Small example batch, same layout as the PyTorch module input.
    N, D_IN = 8, 2
    x = jax.random.normal(key0, (N, D_IN), dtype=jnp.float32)

    out = jax.block_until_ready(linreg_forward(x, weight, bias))
    ref = x @ weight.T + bias
    assert out.shape == (N, 1)
    assert jnp.allclose(out, ref, atol=1e-5, rtol=1e-5)

    # Also exercise a non-128-aligned batch (padding / ragged path).
    N2 = 1000
    x2 = jax.random.normal(key1, (N2, D_IN), dtype=jnp.float32)
    out2 = jax.block_until_ready(linreg_forward(x2, weight, bias))
    ref2 = x2 @ weight.T + bias
    assert out2.shape == (N2, 1)
    assert jnp.allclose(out2, ref2, atol=1e-5, rtol=1e-5)

    print("KERNEL_OK")
</pallas_src>

<mosaic_0001>
module attributes {stable_mosaic.version = 11 : i64} {
  func.func @linreg_kernel(%arg0: i32, %arg1: memref<2x8x128xf32, #tpu.memory_space<vmem>>, %arg2: memref<3xf32, #tpu.memory_space<smem>>, %arg3: memref<8x128xf32, #tpu.memory_space<vmem>>) attributes {dimension_semantics = [#tpu.dimension_semantics<parallel>], iteration_bounds = array<i64: 1>, scalar_prefetch = 0 : i64, scratch_operands = 0 : i64, tpu.core_type = #tpu.core_type<tc>, window_params = [{transform_indices = @transform_0, window_bounds = array<i64: 2, 8, 128>}, {transform_indices = @transform_1, window_bounds = array<i64: 3>}, {transform_indices = @transform_2, window_bounds = array<i64: 8, 128>}]} {
    %c0 = arith.constant 0 : index
    %0 = memref.load %arg2[%c0] : memref<3xf32, #tpu.memory_space<smem>>
    %c1 = arith.constant 1 : index
    %1 = memref.load %arg2[%c1] : memref<3xf32, #tpu.memory_space<smem>>
    %c2 = arith.constant 2 : index
    %2 = memref.load %arg2[%c2] : memref<3xf32, #tpu.memory_space<smem>>
    %c0_0 = arith.constant 0 : index
    %c0_1 = arith.constant 0 : index
    %c0_2 = arith.constant 0 : index
    %3 = vector.load %arg1[%c0_0, %c0_1, %c0_2] : memref<2x8x128xf32, #tpu.memory_space<vmem>>, vector<1x8x128xf32>
    %4 = vector.shape_cast %3 : vector<1x8x128xf32> to vector<8x128xf32>
    %5 = vector.broadcast %0 : f32 to vector<8x128xf32>
    %6 = arith.mulf %4, %5 : vector<8x128xf32>
    %c1_3 = arith.constant 1 : index
    %c0_4 = arith.constant 0 : index
    %c0_5 = arith.constant 0 : index
    %7 = vector.load %arg1[%c1_3, %c0_4, %c0_5] : memref<2x8x128xf32, #tpu.memory_space<vmem>>, vector<1x8x128xf32>
    %8 = vector.shape_cast %7 : vector<1x8x128xf32> to vector<8x128xf32>
    %9 = vector.broadcast %1 : f32 to vector<8x128xf32>
    %10 = arith.mulf %8, %9 : vector<8x128xf32>
    %11 = arith.addf %6, %10 : vector<8x128xf32>
    %12 = vector.broadcast %2 : f32 to vector<8x128xf32>
    %13 = arith.addf %11, %12 : vector<8x128xf32>
    %c0_6 = arith.constant 0 : index
    %c0_7 = arith.constant 0 : index
    %14 = vector.load %arg3[%c0_6, %c0_7] : memref<8x128xf32, #tpu.memory_space<vmem>>, vector<8x128xf32>
    tpu.vector_store %arg3[%c0_6, %c0_7], %13 {strides = array<i32>} : memref<8x128xf32, #tpu.memory_space<vmem>>, vector<8x128xf32>,
    return
  }
  func.func @transform_0(%arg0: i32) -> (i32, i32, i32) {
    %c0_i32 = arith.constant 0 : i32
    %c0_i32_0 = arith.constant 0 : i32
    %c0_i32_1 = arith.constant 0 : i32
    return %c0_i32, %arg0, %c0_i32_0 : i32, i32, i32
  }
  func.func @transform_1(%arg0: i32) -> i32 {
    %c0_i32 = arith.constant 0 : i32
    %c0_i32_0 = arith.constant 0 : i32
    return %c0_i32 : i32
  }
  func.func @transform_2(%arg0: i32) -> (i32, i32) {
    %c0_i32 = arith.constant 0 : i32
    %c0_i32_0 = arith.constant 0 : i32
    return %arg0, %c0_i32 : i32, i32
  }
}

</mosaic_0001>

<llo_original>
// kernel: tpu_custom_call.1
$region0: #{tpu_custom_call.1}
  #allocation0 [shape = 'u32[]', space=smem, size = 0x4, offset = 0x4, fixed_abs, tag = 'smem constant byte address 0x4 - core index']
  #allocation1 [shape = 'u32[72,128]{1,0:T(1,128)}', space=vmem, size = 0x9000, scoped, tag = 'internal scratch']
  %s0 = inlined_call_operand.hbm [shape: f32[2,8,128], index: 0, kind: input, shape index: {}]
  %s1 = inlined_call_operand.hbm [shape: f32[3], index: 1, kind: input, shape index: {}]
  %s2 = inlined_call_operand.hbm [shape: f32[8,128], index: 2, kind: output, shape index: {}]
  %s3 = sld [smem:[#allocation0]]
  $region26: #{tpu_custom_call.1} parent=0
    _
  %s5 = ssub.s32 1, %s3
  %s6 = scalar_select 0, %s5, %s3
  $region1: #{tpu_custom_call.1} parent=0
    #allocation2 [shape = 'u8[8192]{0}', space=vmem, size = 0x2000, scoped, tag = 'input window, operand 0, single buffered']
    #allocation3 [shape = 's32[1]{0}', space=sflag, size = 0x4, scoped, tag = 'scoped memory for tpu_custom_call.1']
    #allocation4 [shape = 's32[1]{0}', space=sflag, size = 0x4, scoped, tag = 'scoped memory for tpu_custom_call.1']
    #allocation5 [shape = 's32[1]{0}', space=sflag, size = 0x4, scoped, tag = 'scoped memory for tpu_custom_call.1']
    #allocation6 [shape = 'u8[512]{0}', space=smem, size = 0x200, scoped, tag = 'input window, operand 1, single buffered']
    #allocation7 [shape = 'u8[4096]{0}', space=vmem, size = 0x1000, scoped, tag = 'output window, operand 0, single buffered']
    %7 = vsyncpa [#allocation3], 0
    %8 = vsyncpa [#allocation5], 0
    %9 = vsyncpa [#allocation4], 0
    // Predicated region
    $region2: #{tpu_custom_call.1} parent=1 // pred_check
      _
    $region3: #{tpu_custom_call.1} parent=1 // pred_check_branch
      %11 = sbr.rel (0) target = $region5
    $region4: #{tpu_custom_call.1} parent=1 // pred_region
      %13 = vsyncadd [#allocation3], 0
      %s14 = sshll.u32 %s0, 4
      %s15 = int_to_ptr.hbm [resolvable:$true] %s14
      %s16 = sshll.u32 [#allocation2], 4
      %s17 = int_to_ptr.vmem [resolvable:$true] %s16
      %22 = dma.hbm_to_vmem [thread:$0]  %s15, 256, %s17, [#allocation3], 128, 128, 8
    $region5: #{tpu_custom_call.1} parent=1 // pred_fallthru
      _
    // Predicated region
    $region6: #{tpu_custom_call.1} parent=1 // pred_check
      _
    $region7: #{tpu_custom_call.1} parent=1 // pred_check_branch
      %24 = sbr.rel (0) target = $region9
    $region8: #{tpu_custom_call.1} parent=1 // pred_region
      %26 = vsyncadd [#allocation5], 0
      %s28 = sshll.u32 %s1, 4
      %s29 = int_to_ptr.hbm [resolvable:$true] %s28
      %31 = dma.hbm_to_smem %s29, 16, [#allocation6], [#allocation5]
    $region9: #{tpu_custom_call.1} parent=1 // pred_fallthru
      _
    // Predicated region
    $region10: #{tpu_custom_call.1} parent=1 // pred_check
      _
    $region11: #{tpu_custom_call.1} parent=1 // pred_check_branch
      %33 = sbr.rel (0) target = $region13
    $region12: #{tpu_custom_call.1} parent=1 // pred_region
      %35 = dma.done [#allocation3], 256
    $region13: #{tpu_custom_call.1} parent=1 // pred_fallthru
      _
    // Predicated region
    $region14: #{tpu_custom_call.1} parent=1 // pred_check
      _
    $region15: #{tpu_custom_call.1} parent=1 // pred_check_branch
      %37 = sbr.rel (0) target = $region17
    $region16: #{tpu_custom_call.1} parent=1 // pred_region
      %39 = dma.done [#allocation5], 16
    $region17: #{tpu_custom_call.1} parent=1 // pred_fallthru
      _
    %40 = sfence
    %s41 = sld [smem:[#allocation6]]
    %s42 = sld [smem:[#allocation6 + $0x1]]
    %s43 = sld [smem:[#allocation6 + $0x2]]
    %v44 = vld [vmem:[#allocation2] sm:$0xff]
    %v45 = vstv %s41
    %v46 = vmul.f32 %v44, %v45
    %s47 = scalar_lea.vmem [#allocation2], 8
    %v48 = vld [vmem:[%s47] sm:$0xff]
    %v49 = vstv %s42
    %v50 = vmul.f32 %v48, %v49
    %v51 = vadd.f32 %v46, %v50
    %v52 = vstv %s43
    %v53 = vadd.f32 %v51, %v52
    %54 = vst [vmem:[#allocation7] sm:$0xff] %v53
    // Predicated region
    $region18: #{tpu_custom_call.1} parent=1 // pred_check
      _
    $region19: #{tpu_custom_call.1} parent=1 // pred_check_branch
      %56 = sbr.rel (0) target = $region21
    $region20: #{tpu_custom_call.1} parent=1 // pred_region
      %58 = vsyncadd [#allocation4], 0
      %s60 = sshll.u32 [#allocation7], 4
      %s61 = int_to_ptr.vmem [resolvable:$true] %s60
      %s62 = sshll.u32 %s2, 4
      %s63 = int_to_ptr.hbm [resolvable:$true] %s62
      %65 = dma.vmem_to_hbm [thread:$0]  %s61, 128, %s63, [#allocation4]
    $region21: #{tpu_custom_call.1} parent=1 // pred_fallthru
      _
    // Predicated region
    $region22: #{tpu_custom_call.1} parent=1 // pred_check
      _
    $region23: #{tpu_custom_call.1} parent=1 // pred_check_branch
      %67 = sbr.rel (0) target = $region25
    $region24: #{tpu_custom_call.1} parent=1 // pred_region
      %69 = dma.done [#allocation4], 128
    $region25: #{tpu_custom_call.1} parent=1 // pred_fallthru
      _
    %70 = vsyncpa [#allocation3], 1
    %71 = vsyncpa [#allocation4], 1
    %72 = vsyncpa [#allocation5], 1

</llo_original>
